<compile_context>
chip_gen: v7x
topology: tpu7x:2x2x1
jax: 0.10.0
libtpu: 0.0.40
codegen_flags: <defaults>
</compile_context>

<pallas_src>
import math

import jax
import jax.numpy as jnp
from jax.experimental import pallas as pl
from jax.experimental.pallas import tpu as pltpu

INPUT_DIM = 2
HIDDEN_DIM = 10
OUTPUT_DIM = 1


def _mlp_kernel(xT_ref, w1_ref, b1_ref, w2_ref, b2_ref, o_ref):
    """Transposed-layout MLP tile.

    xT_ref: (INPUT_DIM, TB)      w1_ref: (HIDDEN_DIM, INPUT_DIM)  [PyTorch layout]
    b1_ref: (HIDDEN_DIM, 1)      w2_ref: (HIDDEN_DIM, OUTPUT_DIM)
    b2_ref: (OUTPUT_DIM, 1)      o_ref:  (OUTPUT_DIM, TB)
    """
    xT = xT_ref[...]                                    # (2, TB)
    w1 = w1_ref[...]                                    # (10, 2)

    # Layer 1: h^T[j, b] = sum_i w1[j, i] * x^T[i, b] + b1[j]
    # K = INPUT_DIM = 2 -> unrolled broadcast FMAs on the VPU (no MXU).
    hT = w1[:, 0:1] * xT[0:1, :]                        # (10,1)*(1,TB) -> (10,TB)
    for i in range(1, INPUT_DIM):
        hT = hT + w1[:, i:i + 1] * xT[i:i + 1, :]
    hT = jnp.maximum(hT + b1_ref[...], 0.0)             # bias + ReLU, (10, TB)

    # Layer 2: z^T = sum_j w2[j] * h^T[j, :] + b2  -> VPU mul + sublane reduce.
    zT = jnp.sum(w2_ref[...] * hT, axis=0, keepdims=True) + b2_ref[...]  # (1, TB)

    # Sigmoid on the EUP: 1 / (1 + exp(-z)) with approximate reciprocal.
    o_ref[...] = pl.reciprocal(1.0 + jnp.exp(-zT), approx=True).astype(o_ref.dtype)


def neural_network_forward(x, w1, b1, w2, b2, *, tile_b=2048):
    """x: (B, INPUT_DIM) f32. Returns (B, OUTPUT_DIM) f32.

    Parameter layouts (see init_params):
      w1: (HIDDEN_DIM, INPUT_DIM)   -- PyTorch layer_1.weight as-is
      b1: (HIDDEN_DIM, 1)
      w2: (HIDDEN_DIM, OUTPUT_DIM)  -- PyTorch layer_2.weight transposed
      b2: (OUTPUT_DIM, 1)
    """
    B = x.shape[0]

    # Batch tile: at most `tile_b`, at least 128 (lane width), power-of-two-ish.
    # VMEM budget is trivial here (tile is a few KiB) even on v7x's 64 MiB.
    tb = min(tile_b, max(128, pl.next_power_of_2(B)))
    Bp = pl.cdiv(B, tb) * tb

    xT = x.T                                            # (INPUT_DIM, B), lane-dense batch
    if Bp != B:
        xT = jnp.pad(xT, ((0, 0), (0, Bp - B)))

    oT = pl.pallas_call(
        _mlp_kernel,
        out_shape=jax.ShapeDtypeStruct((OUTPUT_DIM, Bp), jnp.float32),
        grid=(Bp // tb,),
        in_specs=[
            # x^T tiled along batch; weights/biases resident (constant index_map).
            pl.BlockSpec((INPUT_DIM, tb), lambda i: (0, i)),
            pl.BlockSpec(w1.shape, lambda i: (0, 0)),
            pl.BlockSpec(b1.shape, lambda i: (0, 0)),
            pl.BlockSpec(w2.shape, lambda i: (0, 0)),
            pl.BlockSpec(b2.shape, lambda i: (0, 0)),
        ],
        out_specs=pl.BlockSpec((OUTPUT_DIM, tb), lambda i: (0, i)),
        compiler_params=pltpu.CompilerParams(
            dimension_semantics=("parallel",)),      # v7x: shard batch tiles over 2 TCs
    )(xT, w1, b1, w2, b2)

    return oT[:, :B].T                                  # back to (B, OUTPUT_DIM)


def init_params(key):
    """Deterministic init mirroring the PyTorch module's __init__.

    layer_1.weight: kaiming_uniform_ (nonlinearity='relu') on shape (hidden, in)
    layer_1.bias / layer_2.*: nn.Linear default U(-1/sqrt(fan_in), 1/sqrt(fan_in))
    Returned in the kernel's transposed-compute layout (see neural_network_forward).
    """
    k1, k2, k3, k4 = jax.random.split(key, 4)

    gain = math.sqrt(2.0)                               # relu gain
    bound1_w = gain * math.sqrt(3.0 / INPUT_DIM)
    w1 = jax.random.uniform(k1, (HIDDEN_DIM, INPUT_DIM), jnp.float32,
                            -bound1_w, bound1_w)        # PyTorch layout (out, in)
    bound1_b = 1.0 / math.sqrt(INPUT_DIM)
    b1 = jax.random.uniform(k2, (HIDDEN_DIM,), jnp.float32, -bound1_b, bound1_b)

    bound2 = 1.0 / math.sqrt(HIDDEN_DIM)
    w2 = jax.random.uniform(k3, (OUTPUT_DIM, HIDDEN_DIM), jnp.float32,
                            -bound2, bound2)
    b2 = jax.random.uniform(k4, (OUTPUT_DIM,), jnp.float32, -bound2, bound2)

    return (w1,                                   # (HIDDEN_DIM, INPUT_DIM)
            b1.reshape(HIDDEN_DIM, 1),            # (HIDDEN_DIM, 1)
            w2.T,                                 # (HIDDEN_DIM, OUTPUT_DIM)
            b2.reshape(OUTPUT_DIM, 1))            # (OUTPUT_DIM, 1)


if __name__ == "__main__":
    key = jax.random.PRNGKey(0)
    kx, kp = jax.random.split(key)

    batch = 8
    x = jax.random.normal(kx, (batch, INPUT_DIM), jnp.float32)
    w1, b1, w2, b2 = init_params(kp)

    out = neural_network_forward(x, w1, b1, w2, b2)
    out = jax.block_until_ready(out)

    # Pure-JAX reference (PyTorch semantics: y = x @ W.T + b).
    h_ref = jnp.maximum(x @ w1.T + b1.T, 0.0)
    ref = jax.nn.sigmoid(h_ref @ w2 + b2.T)

    assert out.shape == (batch, OUTPUT_DIM)
    # approx reciprocal on the EUP -> allow ~1e-3 slack
    assert jnp.allclose(out, ref, atol=2e-3, rtol=2e-3)

    print("KERNEL_OK")
</pallas_src>

<mosaic_0001>
module attributes {stable_mosaic.version = 11 : i64} {
  func.func @_mlp_kernel(%arg0: i32, %arg1: memref<2x128xf32, #tpu.memory_space<vmem>>, %arg2: memref<10x2xf32, #tpu.memory_space<vmem>>, %arg3: memref<10x1xf32, #tpu.memory_space<vmem>>, %arg4: memref<10x1xf32, #tpu.memory_space<vmem>>, %arg5: memref<1x1xf32, #tpu.memory_space<vmem>>, %arg6: memref<1x128xf32, #tpu.memory_space<vmem>>) attributes {dimension_semantics = [#tpu.dimension_semantics<parallel>], iteration_bounds = array<i64: 1>, scalar_prefetch = 0 : i64, scratch_operands = 0 : i64, tpu.core_type = #tpu.core_type<tc>, window_params = [{transform_indices = @transform_0, window_bounds = array<i64: 2, 128>}, {pipeline_mode = #tpu.pipeline_mode<synchronous>, transform_indices = @transform_1, window_bounds = array<i64: 10, 2>}, {pipeline_mode = #tpu.pipeline_mode<synchronous>, transform_indices = @transform_2, window_bounds = array<i64: 10, 1>}, {pipeline_mode = #tpu.pipeline_mode<synchronous>, transform_indices = @transform_3, window_bounds = array<i64: 10, 1>}, {pipeline_mode = #tpu.pipeline_mode<synchronous>, transform_indices = @transform_4, window_bounds = array<i64: 1, 1>}, {transform_indices = @transform_5, window_bounds = array<i64: 1, 128>}]} {
    %c0 = arith.constant 0 : index
    %c0_0 = arith.constant 0 : index
    %0 = vector.load %arg1[%c0, %c0_0] : memref<2x128xf32, #tpu.memory_space<vmem>>, vector<2x128xf32>
    %c0_1 = arith.constant 0 : index
    %c0_2 = arith.constant 0 : index
    %1 = vector.load %arg2[%c0_1, %c0_2] : memref<10x2xf32, #tpu.memory_space<vmem>>, vector<10x2xf32>
    %2 = vector.extract_strided_slice %1 {offsets = [0, 0], sizes = [10, 1], strides = [1, 1]} : vector<10x2xf32> to vector<10x1xf32>
    %3 = vector.extract_strided_slice %0 {offsets = [0, 0], sizes = [1, 128], strides = [1, 1]} : vector<2x128xf32> to vector<1x128xf32>
    %4 = vector.broadcast %2 : vector<10x1xf32> to vector<10x128xf32>
    %5 = vector.broadcast %3 : vector<1x128xf32> to vector<10x128xf32>
    %6 = arith.mulf %4, %5 : vector<10x128xf32>
    %7 = vector.extract_strided_slice %1 {offsets = [0, 1], sizes = [10, 1], strides = [1, 1]} : vector<10x2xf32> to vector<10x1xf32>
    %8 = vector.extract_strided_slice %0 {offsets = [1, 0], sizes = [1, 128], strides = [1, 1]} : vector<2x128xf32> to vector<1x128xf32>
    %9 = vector.broadcast %7 : vector<10x1xf32> to vector<10x128xf32>
    %10 = vector.broadcast %8 : vector<1x128xf32> to vector<10x128xf32>
    %11 = arith.mulf %9, %10 : vector<10x128xf32>
    %12 = arith.addf %6, %11 : vector<10x128xf32>
    %c0_3 = arith.constant 0 : index
    %c0_4 = arith.constant 0 : index
    %13 = vector.load %arg3[%c0_3, %c0_4] : memref<10x1xf32, #tpu.memory_space<vmem>>, vector<10x1xf32>
    %14 = vector.broadcast %13 : vector<10x1xf32> to vector<10x128xf32>
    %15 = arith.addf %12, %14 : vector<10x128xf32>
    %cst = arith.constant 0.000000e+00 : f32
    %16 = vector.broadcast %cst : f32 to vector<10x128xf32>
    %17 = arith.maximumf %15, %16 : vector<10x128xf32>
    %c0_5 = arith.constant 0 : index
    %c0_6 = arith.constant 0 : index
    %18 = vector.load %arg4[%c0_5, %c0_6] : memref<10x1xf32, #tpu.memory_space<vmem>>, vector<10x1xf32>
    %19 = vector.broadcast %18 : vector<10x1xf32> to vector<10x128xf32>
    %20 = arith.mulf %19, %17 : vector<10x128xf32>
    %cst_7 = arith.constant dense<0.000000e+00> : vector<128xf32>
    %21 = vector.multi_reduction <add>, %20, %cst_7 [0] : vector<10x128xf32> to vector<128xf32>
    %22 = vector.shape_cast %21 : vector<128xf32> to vector<1x128xf32>
    %c0_8 = arith.constant 0 : index
    %c0_9 = arith.constant 0 : index
    %23 = vector.load %arg5[%c0_8, %c0_9] : memref<1x1xf32, #tpu.memory_space<vmem>>, vector<1x1xf32>
    %24 = vector.broadcast %23 : vector<1x1xf32> to vector<1x128xf32>
    %25 = arith.addf %22, %24 : vector<1x128xf32>
    %cst_10 = arith.constant 0.000000e+00 : f32
    %26 = vector.broadcast %cst_10 : f32 to vector<1x128xf32>
    %27 = arith.subf %26, %25 : vector<1x128xf32>
    %28 = math.exp %27 : vector<1x128xf32>
    %cst_11 = arith.constant 1.000000e+00 : f32
    %29 = vector.broadcast %cst_11 : f32 to vector<1x128xf32>
    %30 = arith.addf %29, %28 : vector<1x128xf32>
    %31 = tpu.reciprocal %30 {approx = true} : vector<1x128xf32> -> vector<1x128xf32>
    %c0_12 = arith.constant 0 : index
    %c0_13 = arith.constant 0 : index
    %32 = vector.load %arg6[%c0_12, %c0_13] : memref<1x128xf32, #tpu.memory_space<vmem>>, vector<1x128xf32>
    tpu.vector_store %arg6[%c0_12, %c0_13], %31 {strides = array<i32>} : memref<1x128xf32, #tpu.memory_space<vmem>>, vector<1x128xf32>,
    return
  }
  func.func @transform_0(%arg0: i32) -> (i32, i32) {
    %c0_i32 = arith.constant 0 : i32
    %c0_i32_0 = arith.constant 0 : i32
    return %c0_i32, %arg0 : i32, i32
  }
  func.func @transform_1(%arg0: i32) -> (i32, i32) {
    %c0_i32 = arith.constant 0 : i32
    %c0_i32_0 = arith.constant 0 : i32
    %c0_i32_1 = arith.constant 0 : i32
    return %c0_i32, %c0_i32_0 : i32, i32
  }
  func.func @transform_2(%arg0: i32) -> (i32, i32) {
    %c0_i32 = arith.constant 0 : i32
    %c0_i32_0 = arith.constant 0 : i32
    %c0_i32_1 = arith.constant 0 : i32
    return %c0_i32, %c0_i32_0 : i32, i32
  }
  func.func @transform_3(%arg0: i32) -> (i32, i32) {
    %c0_i32 = arith.constant 0 : i32
    %c0_i32_0 = arith.constant 0 : i32
    %c0_i32_1 = arith.constant 0 : i32
    return %c0_i32, %c0_i32_0 : i32, i32
  }
  func.func @transform_4(%arg0: i32) -> (i32, i32) {
    %c0_i32 = arith.constant 0 : i32
    %c0_i32_0 = arith.constant 0 : i32
    %c0_i32_1 = arith.constant 0 : i32
    return %c0_i32, %c0_i32_0 : i32, i32
  }
  func.func @transform_5(%arg0: i32) -> (i32, i32) {
    %c0_i32 = arith.constant 0 : i32
    %c0_i32_0 = arith.constant 0 : i32
    return %c0_i32, %arg0 : i32, i32
  }
}

</mosaic_0001>

<llo_original>
// kernel: tpu_custom_call.1
$region0: #{tpu_custom_call.1}
  #allocation0 [shape = 'u32[]', space=smem, size = 0x4, offset = 0x4, fixed_abs, tag = 'smem constant byte address 0x4 - core index']
  #allocation1 [shape = 'u32[144,128]{1,0:T(1,128)}', space=vmem, size = 0x12000, scoped, tag = 'internal scratch']
  #allocation2 [shape = 'f32[1,1]{1,0:T(1,128)S(1)}', space=vmem, size = 0x200, scoped, tag = 'scoped memory for tpu_custom_call.1']
  %s0 = inlined_call_operand.vmem [shape: f32[2,128], index: 0, kind: input, shape index: {}]
  %s1 = inlined_call_operand.vmem [shape: f32[10,2], index: 1, kind: input, shape index: {}]
  %s2 = inlined_call_operand.vmem [shape: f32[10,1], index: 2, kind: input, shape index: {}]
  %s3 = inlined_call_operand.vmem [shape: f32[10,1], index: 3, kind: input, shape index: {}]
  %s4 = inlined_call_operand.<no memory space> [shape: f32[1,1], index: 4, kind: input, shape index: {}]
  %s5 = inlined_call_operand.hbm [shape: f32[1,128], index: 5, kind: output, shape index: {}]
  %s6 = sld [smem:[#allocation0]]
  $region30: #{tpu_custom_call.1} parent=0
    _
  %s8 = ssub.s32 1, %s6
  %s9 = scalar_select 0, %s8, %s6
  %v10 = vstv %s4
  %11 = vst [vmem:[#allocation2] sm:$0x1] %v10
  $region1: #{tpu_custom_call.1} parent=0
    #allocation3 [shape = 'u8[512]{0}', space=vmem, size = 0x400, scoped, tag = 'output window, operand 0, single buffered']
    #allocation4 [shape = 's32[1]{0}', space=sflag, size = 0x4, scoped, tag = 'scoped memory for tpu_custom_call.1']
    %12 = vsyncpa [#allocation4], 0
    // Predicated region
    $region2: #{tpu_custom_call.1} parent=1 // pred_check
      _
    $region3: #{tpu_custom_call.1} parent=1 // pred_check_branch
      %14 = sbr.rel (0) target = $region5
    $region4: #{tpu_custom_call.1} parent=1 // pred_region
      _
    $region5: #{tpu_custom_call.1} parent=1 // pred_fallthru
      _
    // Predicated region
    $region6: #{tpu_custom_call.1} parent=1 // pred_check
      _
    $region7: #{tpu_custom_call.1} parent=1 // pred_check_branch
      %16 = sbr.rel (0) target = $region9
    $region8: #{tpu_custom_call.1} parent=1 // pred_region
      _
    $region9: #{tpu_custom_call.1} parent=1 // pred_fallthru
      _
    // Predicated region
    $region10: #{tpu_custom_call.1} parent=1 // pred_check
      _
    $region11: #{tpu_custom_call.1} parent=1 // pred_check_branch
      %18 = sbr.rel (0) target = $region13
    $region12: #{tpu_custom_call.1} parent=1 // pred_region
      _
    $region13: #{tpu_custom_call.1} parent=1 // pred_fallthru
      _
    // Predicated region
    $region14: #{tpu_custom_call.1} parent=1 // pred_check
      _
    $region15: #{tpu_custom_call.1} parent=1 // pred_check_branch
      %20 = sbr.rel (0) target = $region17
    $region16: #{tpu_custom_call.1} parent=1 // pred_region
      _
    $region17: #{tpu_custom_call.1} parent=1 // pred_fallthru
      _
    // Predicated region
    $region18: #{tpu_custom_call.1} parent=1 // pred_check
      _
    $region19: #{tpu_custom_call.1} parent=1 // pred_check_branch
      %22 = sbr.rel (0) target = $region21
    $region20: #{tpu_custom_call.1} parent=1 // pred_region
      _
    $region21: #{tpu_custom_call.1} parent=1 // pred_fallthru
      _
    %v23 = vld [vmem:[%s0] sm:$0x3]
    %v24 = vld [vmem:[%s1] sm:$0xff]
    %v25 = vld [vmem:[%s1 + $0x8] sm:$0x3]
    %27 = vset.pattern.permute.xlu0 0
    %28 = vperm.xlu0 %27, %v24
    %v29 = vpop.permute.xlu0 %28
    %32 = vset.pattern.permute.xlu0 0
    %33 = vperm.xlu0 %32, %v25
    %v34 = vpop.permute.xlu0 %33
    %v36 = vlaneseq
    %v37 = vshrl.u32 %v36, 7
    %v38 = vsub.s32 0, %v37
    %v39 = vrot.slane %v23, %v38
    %v40 = vmul.f32 %v29, %v39
    %v41 = vmul.f32 %v34, %v39
    %42 = vset.pattern.permute.xlu0 1
    %43 = vperm.xlu0 %42, %v24
    %v44 = vpop.permute.xlu0 %43
    %46 = vset.pattern.permute.xlu0 1
    %47 = vperm.xlu0 %46, %v25
    %v48 = vpop.permute.xlu0 %47
    %v50 = vlaneseq
    %v51 = vshrl.u32 %v50, 7
    %v52 = vsub.s32 1, %v51
    %v53 = vrot.slane %v23, %v52
    %v54 = vmul.f32 %v44, %v53
    %v55 = vmul.f32 %v48, %v53
    %v56 = vadd.f32 %v40, %v54
    %v57 = vadd.f32 %v41, %v55
    %v58 = vld [vmem:[%s2] sm:$0xff]
    %v59 = vld [vmem:[%s2 + $0x8] sm:$0x3]
    %61 = vset.pattern.permute.xlu0 0
    %62 = vperm.xlu0 %61, %v58
    %v63 = vpop.permute.xlu0 %62
    %66 = vset.pattern.permute.xlu0 0
    %67 = vperm.xlu0 %66, %v59
    %v68 = vpop.permute.xlu0 %67
    %v70 = vadd.f32 %v56, %v63
    %v71 = vadd.f32 %v57, %v68
    %v72 = vmax.f32 %v70, 0.0
    %v73 = vmax.f32 %v71, 0.0
    %v74 = vld [vmem:[%s3] sm:$0xff]
    %v75 = vld [vmem:[%s3 + $0x8] sm:$0x3]
    %77 = vset.pattern.permute.xlu0 0
    %78 = vperm.xlu0 %77, %v74
    %v79 = vpop.permute.xlu0 %78
    %82 = vset.pattern.permute.xlu0 0
    %83 = vperm.xlu0 %82, %v75
    %v84 = vpop.permute.xlu0 %83
    %v86 = vmul.f32 %v79, %v72
    %v87 = vmul.f32 %v84, %v73
    %vm88 = vcmask 1041408
    %v89 = vsel %vm88, %v87, 0.0
    %v90 = vadd.f32 %v86, %v89
    %v91 = vrot.slane %v90, 4
    %v92 = vadd.f32 %v90, %v91
    %v93 = vrot.slane %v92, 2
    %v94 = vadd.f32 %v92, %v93
    %v95 = vrot.slane %v94, 1
    %v96 = vadd.f32 %v94, %v95
    %v97 = vld [vmem:[#allocation2] sm:$0x1]
    %99 = vset.pattern.permute.xlu0 0
    %100 = vperm.xlu0 %99, %v97
    %v101 = vpop.permute.xlu0 %100
    %v103 = vlaneseq
    %v104 = vshrl.u32 %v103, 7
    %v105 = vsub.s32 0, %v104
    %v106 = vrot.slane %v101, %v105
    %v107 = vadd.f32 %v96, %v106
    %v108 = vsub.f32 0.0, %v107
    %v109 = vmul.f32 %v108, 1.442695
    %v110 = vpow.pop %v109
    %v111 = vadd.f32 %v110, 1.0
    %v112 = vrcp.pop %v111
    %113 = vst [vmem:[#allocation3] sm:$0x1] %v112
    // Predicated region
    $region22: #{tpu_custom_call.1} parent=1 // pred_check
      _
    $region23: #{tpu_custom_call.1} parent=1 // pred_check_branch
      %115 = sbr.rel (0) target = $region25
    $region24: #{tpu_custom_call.1} parent=1 // pred_region
      %s117 = ssub.s32 16, 16
      %118 = vsyncadd [#allocation4], %s117
      %s120 = sshll.u32 [#allocation3], 4
      %s121 = int_to_ptr.vmem [resolvable:$true] %s120
      %123 = dma.vmem_to_hbm [thread:$0]  %s121, 16, %s5, [#allocation4]
    $region25: #{tpu_custom_call.1} parent=1 // pred_fallthru
      _
    // Predicated region
    $region26: #{tpu_custom_call.1} parent=1 // pred_check
      _
    $region27: #{tpu_custom_call.1} parent=1 // pred_check_branch
      %125 = sbr.rel (0) target = $region29
    $region28: #{tpu_custom_call.1} parent=1 // pred_region
      %126 = dma.done [#allocation4], 16
    $region29: #{tpu_custom_call.1} parent=1 // pred_fallthru
      _
    %127 = vsyncpa [#allocation4], 1

</llo_original>
